<compile_context>
chip_gen: v7x
topology: tpu7x:2x2x1
jax: 0.10.0
libtpu: 0.0.40
codegen_flags: <defaults>
</compile_context>

<pallas_src>
import functools

import jax
import jax.numpy as jnp
from jax.experimental import pallas as pl
from jax.experimental.pallas import tpu as pltpu


# ----------------------------------------------------------------------------
# Pallas kernel: Fold forward for one tile of B_TILE batch elements.
# ----------------------------------------------------------------------------
def fold_kernel(hseed_ref, f1_ref, f2_ref,
                w2_ref, b25_ref, w34_ref,
                w5_ref, w6_ref, b6_ref,
                out_ref):
    bt = f1_ref.shape[0]                      # samples in this tile (static)
    n, hdim = hseed_ref.shape                 # positions, hidden width (static)
    bf16 = jnp.bfloat16

    hs = hseed_ref[...]                       # (N, H)   seed @ W1_seed + b1 (batch-invariant)
    f1 = f1_ref[...]                          # (BT,1,H) x @ W1_feat               (per sample)
    f2 = f2_ref[...]                          # (BT,1,H) x @ W4_feat + b4 + b3 @ W4_fd1

    # ---- folding1 layer 1: ReLU(seed-part + feature-part) ----
    h = jnp.maximum(hs[None, :, :] + f1, 0.0)                     # (BT, N, H) f32
    h = h.reshape(bt * n, hdim)                                   # (BT*N, H)

    # ---- folding1 layer 2: Conv(H -> H/2) + BN + ReLU (bf16 MXU, f32 acc) ----
    h = jnp.dot(h.astype(bf16), w2_ref[...],
                preferred_element_type=jnp.float32)
    h = jnp.maximum(h + b25_ref[0:1, :], 0.0)                     # (BT*N, Hh) f32

    # ---- folding1 layer 3 fused with folding2 layer 1 ----
    # fd1 @ W4_fd1 == h2 @ (W3^T @ W4_fd1^T); fd1's bias is folded into f2.
    g = jnp.dot(h.astype(bf16), w34_ref[...],
                preferred_element_type=jnp.float32)               # (BT*N, H)
    g = jnp.maximum(g.reshape(bt, n, hdim) + f2, 0.0)
    g = g.reshape(bt * n, hdim)                                   # (BT*N, H)

    # ---- folding2 layer 2: Conv(H -> H/2) + BN + ReLU ----
    g = jnp.dot(g.astype(bf16), w5_ref[...],
                preferred_element_type=jnp.float32)
    g = jnp.maximum(g + b25_ref[1:2, :], 0.0)                     # (BT*N, Hh)

    # ---- folding2 layer 3: Conv(H/2 -> 3) ----
    fd2 = jnp.dot(g.astype(bf16), w6_ref[...],
                  preferred_element_type=jnp.float32) + b6_ref[...]   # (BT*N, 3)

    # Lane-dense store in PyTorch layout: (BT, 3, N), last dim = N.
    out_ref[...] = jnp.transpose(fd2.reshape(bt, n, 3), (0, 2, 1))


# ----------------------------------------------------------------------------
# Wrapper helpers.
# ----------------------------------------------------------------------------
def _fold_bn(W, b, gamma, beta, mean, var, eps=1e-5):
    """Fold eval-mode BatchNorm following a 1x1 conv into W_eff, b_eff (f32)."""
    s = gamma / jnp.sqrt(var + eps)
    return W * s[:, None], (b - mean) * s + beta


def make_folding_seed(step, dtype=jnp.float32):
    lin = jnp.linspace(-1.0, 1.0, step, dtype=dtype)
    a = jnp.broadcast_to(lin[None, :], (step, step)).reshape(-1)   # fast axis
    b = jnp.broadcast_to(lin[:, None], (step, step)).reshape(-1)   # slow axis
    return jnp.stack([a, b], axis=0)                               # (2, N)


def _num_tensorcores():
    """2 on v7x (megacore via 'parallel' grid axis), else 1 (v5e/v6e)."""
    try:
        kind = jax.devices()[0].device_kind.lower()
    except Exception:
        return 1
    return 2 if ("v7" in kind or "7x" in kind) else 1


def _choose_b_tile(bs, n_points, num_cores):
    """Samples per grid step.

    Target ~2048 matmul rows per step: amortizes the ~600-cycle per-step
    overhead (>= 4x fewer steps than the old 512-row target) while the mixed
    f32/bf16 live set stays ~10-15 MiB even at H=512, comfortably inside v7x's
    64 MiB physical VMEM.  On 2-TensorCore chips keep at least 2 grid steps so
    both cores get work; on single-TC chips prefer one big step.
    """
    if n_points % 8 != 0:            # keep in-kernel reshapes layout-trivial
        return 1
    target_rows = 2048
    bt = max(1, target_rows // n_points)
    bt = min(bt, bs)
    if num_cores >= 2 and bs >= num_cores:
        bt = min(bt, -(-bs // num_cores))
    return max(bt, 1)


@functools.partial(jax.jit, static_argnames=("step",))
def fold_forward(x, params, step):
    bs, in_channel = x.shape
    N = step * step
    p = params
    f32, bf16 = jnp.float32, jnp.bfloat16
    x = x.astype(f32)

    # ---- fold eval-mode BN into the conv weights (f32, plain JAX glue) ----
    W1, b1 = _fold_bn(p["W1"], p["b1"], p["g1"], p["be1"], p["m1"], p["v1"])
    W2, b2 = _fold_bn(p["W2"], p["b2"], p["g2"], p["be2"], p["m2"], p["v2"])
    W3, b3 = p["W3"], p["b3"]
    W4, b4 = _fold_bn(p["W4"], p["b4"], p["g4"], p["be4"], p["m4"], p["v4"])
    W5, b5 = _fold_bn(p["W5"], p["b5"], p["g5"], p["be5"], p["m5"], p["v5"])
    W6, b6 = p["W6"], p["b6"]

    Hh, H = W2.shape        # Conv(H -> H/2): W2 is (Hh, H)

    # ---- hoisted, batch-invariant / per-sample precomputation (XLA, f32) ----
    seed_t = make_folding_seed(step, f32).T                      # (N, 2)
    hseed = seed_t @ W1[:, :2].T + b1[None, :]                   # (N, H)  seed part + b1
    feat1 = x @ W1[:, 2:].T                                      # (bs, H) feature part
    w4f = W4[:, :3].T                                            # (3, H)  fd1 part of folding2 L1
    w34 = W3.T @ w4f                                             # (Hh, H) fused W3^T @ W4_fd1^T (f32)
    feat2 = x @ W4[:, 3:].T + (b4 + b3 @ w4f)[None, :]           # (bs, H)

    # In-kernel matmul weights in bf16 (native MXU input dtype on v5e/v6e/v7x);
    # biases stay f32 since the elementwise path is f32.
    w2t = W2.T.astype(bf16)                                      # (H, Hh)
    w34 = w34.astype(bf16)                                       # (Hh, H)
    w5t = W5.T.astype(bf16)                                      # (H, Hh)
    w6t = W6.T.astype(bf16)                                      # (Hh, 3)
    b25 = jnp.stack([b2, b5], axis=0).astype(f32)                # (2, Hh)
    b6r = b6.reshape(1, 3).astype(f32)

    feat1 = feat1.reshape(bs, 1, H).astype(f32)
    feat2 = feat2.reshape(bs, 1, H).astype(f32)

    # ---- batch tiling (per-generation): pad bs up instead of shrinking tile ----
    num_cores = _num_tensorcores()
    b_tile = _choose_b_tile(bs, N, num_cores)
    steps = -(-bs // b_tile)
    if num_cores >= 2 and steps > 1:
        steps = -(-steps // num_cores) * num_cores   # even grid -> both TCs busy
    bs_pad = steps * b_tile
    if bs_pad != bs:
        pad = bs_pad - bs
        feat1 = jnp.pad(feat1, ((0, pad), (0, 0), (0, 0)))
        feat2 = jnp.pad(feat2, ((0, pad), (0, 0), (0, 0)))

    # Constant-index blocks: fetched once, no need to double-buffer.
    const = dict(pipeline_mode=pl.Buffered(1))

    out = pl.pallas_call(
        fold_kernel,
        out_shape=jax.ShapeDtypeStruct((bs_pad, 3, N), f32),
        grid=(steps,),
        in_specs=[
            pl.BlockSpec((N, H), lambda i: (0, 0), **const),       # hseed (const)
            pl.BlockSpec((b_tile, 1, H), lambda i: (i, 0, 0)),     # feat1 (per tile)
            pl.BlockSpec((b_tile, 1, H), lambda i: (i, 0, 0)),     # feat2 (per tile)
            pl.BlockSpec((H, Hh), lambda i: (0, 0), **const),      # w2t   (const, bf16)
            pl.BlockSpec((2, Hh), lambda i: (0, 0), **const),      # b2/b5 (const)
            pl.BlockSpec((Hh, H), lambda i: (0, 0), **const),      # w34   (const, bf16)
            pl.BlockSpec((H, Hh), lambda i: (0, 0), **const),      # w5t   (const, bf16)
            pl.BlockSpec((Hh, 3), lambda i: (0, 0), **const),      # w6t   (const, bf16)
            pl.BlockSpec((1, 3), lambda i: (0, 0), **const),       # b6    (const)
        ],
        out_specs=pl.BlockSpec((b_tile, 3, N), lambda i: (i, 0, 0)),
        compiler_params=pltpu.CompilerParams(
            dimension_semantics=("parallel",),
            # Explicit budget: fits the chosen tiles at realistic PoinTr widths
            # and respects v7x's 64 MiB physical VMEM (<= ~48 MiB recommended).
            vmem_limit_bytes=48 * 1024 * 1024,
        ),
    )(
        hseed.astype(f32), feat1, feat2,
        w2t, b25, w34, w5t, w6t, b6r,
    )
    # Already in PyTorch layout (bs, 3, N); drop any batch padding.
    return out[:bs]


# ----------------------------------------------------------------------------
# Pure-JAX reference (mirrors the PyTorch graph, eval-mode BN) for validation.
# ----------------------------------------------------------------------------
def fold_ref(x, params, step, eps=1e-5):
    bs, cin = x.shape
    p = params
    N = step * step
    feats = jnp.broadcast_to(x[:, :, None], (bs, cin, N))             # (bs,Cin,N)
    seed = jnp.broadcast_to(make_folding_seed(step)[None], (bs, 2, N))

    def conv_bn_relu(h, W, b, g, be, m, v):
        y = jnp.einsum("oc,bcn->bon", W, h) + b[None, :, None]
        y = (y - m[None, :, None]) / jnp.sqrt(v[None, :, None] + eps)
        y = y * g[None, :, None] + be[None, :, None]
        return jnp.maximum(y, 0.0)

    def conv(h, W, b):
        return jnp.einsum("oc,bcn->bon", W, h) + b[None, :, None]

    h = jnp.concatenate([seed, feats], axis=1)
    h = conv_bn_relu(h, p["W1"], p["b1"], p["g1"], p["be1"], p["m1"], p["v1"])
    h = conv_bn_relu(h, p["W2"], p["b2"], p["g2"], p["be2"], p["m2"], p["v2"])
    fd1 = conv(h, p["W3"], p["b3"])
    h = jnp.concatenate([fd1, feats], axis=1)
    h = conv_bn_relu(h, p["W4"], p["b4"], p["g4"], p["be4"], p["m4"], p["v4"])
    h = conv_bn_relu(h, p["W5"], p["b5"], p["g5"], p["be5"], p["m5"], p["v5"])
    return conv(h, p["W6"], p["b6"])


# ----------------------------------------------------------------------------
# Deterministic parameter init (synthetic; no checkpoint loading).
# ----------------------------------------------------------------------------
def init_params(key, in_channel, hidden_dim):
    H, Hh = hidden_dim, hidden_dim // 2
    keys = iter(jax.random.split(key, 40))

    def w(shape, scale=0.1):
        return scale * jax.random.normal(next(keys), shape, jnp.float32)

    def bn(c):
        return dict(
            g=1.0 + 0.1 * jax.random.normal(next(keys), (c,), jnp.float32),
            be=0.1 * jax.random.normal(next(keys), (c,), jnp.float32),
            m=0.1 * jax.random.normal(next(keys), (c,), jnp.float32),
            v=0.5 + jnp.abs(jax.random.normal(next(keys), (c,), jnp.float32)),
        )

    p = {}
    # folding1
    p["W1"], p["b1"] = w((H, in_channel + 2)), w((H,))
    b1n = bn(H); p["g1"], p["be1"], p["m1"], p["v1"] = b1n["g"], b1n["be"], b1n["m"], b1n["v"]
    p["W2"], p["b2"] = w((Hh, H)), w((Hh,))
    b2n = bn(Hh); p["g2"], p["be2"], p["m2"], p["v2"] = b2n["g"], b2n["be"], b2n["m"], b2n["v"]
    p["W3"], p["b3"] = w((3, Hh)), w((3,))
    # folding2
    p["W4"], p["b4"] = w((H, in_channel + 3)), w((H,))
    b4n = bn(H); p["g4"], p["be4"], p["m4"], p["v4"] = b4n["g"], b4n["be"], b4n["m"], b4n["v"]
    p["W5"], p["b5"] = w((Hh, H)), w((Hh,))
    b5n = bn(Hh); p["g5"], p["be5"], p["m5"], p["v5"] = b5n["g"], b5n["be"], b5n["m"], b5n["v"]
    p["W6"], p["b6"] = w((3, Hh)), w((3,))
    return p


if __name__ == "__main__":
    # Small shapes consistent with the module: bs=2, in_channel=32, step=8
    # (N = 64 points per sample), hidden_dim=32.
    bs, in_channel, step, hidden_dim = 2, 32, 8, 32

    key = jax.random.PRNGKey(0)
    kx, kp = jax.random.split(key)
    x = jax.random.normal(kx, (bs, in_channel), jnp.float32)
    params = init_params(kp, in_channel, hidden_dim)

    out = fold_forward(x, params, step=step)
    out = jax.block_until_ready(out)

    ref = fold_ref(x, params, step)
    assert out.shape == (bs, 3, step * step), out.shape
    # bf16 MXU inputs (f32 accumulation) vs the pure-f32 reference: ~1% relative.
    assert jnp.allclose(out, ref, atol=2e-2, rtol=2e-2), (
        float(jnp.max(jnp.abs(out - ref))))

    print("KERNEL_OK")
</pallas_src>

<mosaic_0001>
module attributes {stable_mosaic.version = 11 : i64} {
  func.func @fold_kernel(%arg0: i32, %arg1: memref<64x32xf32, #tpu.memory_space<vmem>>, %arg2: memref<2x1x32xf32, #tpu.memory_space<vmem>>, %arg3: memref<2x1x32xf32, #tpu.memory_space<vmem>>, %arg4: memref<32x16xbf16, #tpu.memory_space<vmem>>, %arg5: memref<2x16xf32, #tpu.memory_space<vmem>>, %arg6: memref<16x32xbf16, #tpu.memory_space<vmem>>, %arg7: memref<32x16xbf16, #tpu.memory_space<vmem>>, %arg8: memref<16x3xbf16, #tpu.memory_space<vmem>>, %arg9: memref<1x3xf32, #tpu.memory_space<vmem>>, %arg10: memref<2x3x64xf32, #tpu.memory_space<vmem>>) attributes {dimension_semantics = [#tpu.dimension_semantics<parallel>], iteration_bounds = array<i64: 1>, scalar_prefetch = 0 : i64, scratch_operands = 0 : i64, tpu.core_type = #tpu.core_type<tc>, window_params = [{pipeline_mode = #tpu.pipeline_mode<synchronous>, transform_indices = @transform_0, window_bounds = array<i64: 64, 32>}, {transform_indices = @transform_1, window_bounds = array<i64: 2, 1, 32>}, {transform_indices = @transform_2, window_bounds = array<i64: 2, 1, 32>}, {pipeline_mode = #tpu.pipeline_mode<synchronous>, transform_indices = @transform_3, window_bounds = array<i64: 32, 16>}, {pipeline_mode = #tpu.pipeline_mode<synchronous>, transform_indices = @transform_4, window_bounds = array<i64: 2, 16>}, {pipeline_mode = #tpu.pipeline_mode<synchronous>, transform_indices = @transform_5, window_bounds = array<i64: 16, 32>}, {pipeline_mode = #tpu.pipeline_mode<synchronous>, transform_indices = @transform_6, window_bounds = array<i64: 32, 16>}, {pipeline_mode = #tpu.pipeline_mode<synchronous>, transform_indices = @transform_7, window_bounds = array<i64: 16, 3>}, {pipeline_mode = #tpu.pipeline_mode<synchronous>, transform_indices = @transform_8, window_bounds = array<i64: 1, 3>}, {transform_indices = @transform_9, window_bounds = array<i64: 2, 3, 64>}]} {
    %c0 = arith.constant 0 : index
    %c0_0 = arith.constant 0 : index
    %0 = vector.load %arg1[%c0, %c0_0] : memref<64x32xf32, #tpu.memory_space<vmem>>, vector<64x32xf32>
    %c0_1 = arith.constant 0 : index
    %c0_2 = arith.constant 0 : index
    %c0_3 = arith.constant 0 : index
    %1 = vector.load %arg2[%c0_1, %c0_2, %c0_3] : memref<2x1x32xf32, #tpu.memory_space<vmem>>, vector<2x1x32xf32>
    %c0_4 = arith.constant 0 : index
    %c0_5 = arith.constant 0 : index
    %c0_6 = arith.constant 0 : index
    %2 = vector.load %arg3[%c0_4, %c0_5, %c0_6] : memref<2x1x32xf32, #tpu.memory_space<vmem>>, vector<2x1x32xf32>
    %3 = vector.shape_cast %0 : vector<64x32xf32> to vector<1x64x32xf32>
    %4 = vector.broadcast %3 : vector<1x64x32xf32> to vector<2x64x32xf32>
    %5 = vector.broadcast %1 : vector<2x1x32xf32> to vector<2x64x32xf32>
    %6 = arith.addf %4, %5 : vector<2x64x32xf32>
    %cst = arith.constant 0.000000e+00 : f32
    %7 = vector.broadcast %cst : f32 to vector<2x64x32xf32>
    %8 = arith.maximumf %6, %7 : vector<2x64x32xf32>
    %9 = vector.shape_cast %8 : vector<2x64x32xf32> to vector<128x32xf32>
    %10 = arith.truncf %9 : vector<128x32xf32> to vector<128x32xbf16>
    %c0_7 = arith.constant 0 : index
    %c0_8 = arith.constant 0 : index
    %11 = vector.load %arg4[%c0_7, %c0_8] : memref<32x16xbf16, #tpu.memory_space<vmem>>, vector<32x16xbf16>
    %cst_9 = arith.constant dense<0.000000e+00> : vector<128x16xf32>
    %12 = tpu.matmul %10, %11, %cst_9 {dimension_numbers = #tpu.dot_dimension_numbers<[1], [0], [0], [1], [0, 0, 1, 1], [], []>} : vector<128x32xbf16>, vector<32x16xbf16>, vector<128x16xf32> -> vector<128x16xf32>
    %c0_10 = arith.constant 0 : index
    %c0_11 = arith.constant 0 : index
    %13 = vector.load %arg5[%c0_10, %c0_11] : memref<2x16xf32, #tpu.memory_space<vmem>>, vector<1x16xf32>
    %14 = vector.broadcast %13 : vector<1x16xf32> to vector<128x16xf32>
    %15 = arith.addf %12, %14 : vector<128x16xf32>
    %cst_12 = arith.constant 0.000000e+00 : f32
    %16 = vector.broadcast %cst_12 : f32 to vector<128x16xf32>
    %17 = arith.maximumf %15, %16 : vector<128x16xf32>
    %18 = arith.truncf %17 : vector<128x16xf32> to vector<128x16xbf16>
    %c0_13 = arith.constant 0 : index
    %c0_14 = arith.constant 0 : index
    %19 = vector.load %arg6[%c0_13, %c0_14] : memref<16x32xbf16, #tpu.memory_space<vmem>>, vector<16x32xbf16>
    %cst_15 = arith.constant dense<0.000000e+00> : vector<128x32xf32>
    %20 = tpu.matmul %18, %19, %cst_15 {dimension_numbers = #tpu.dot_dimension_numbers<[1], [0], [0], [1], [0, 0, 1, 1], [], []>} : vector<128x16xbf16>, vector<16x32xbf16>, vector<128x32xf32> -> vector<128x32xf32>
    %21 = vector.shape_cast %20 : vector<128x32xf32> to vector<2x64x32xf32>
    %22 = vector.broadcast %2 : vector<2x1x32xf32> to vector<2x64x32xf32>
    %23 = arith.addf %21, %22 : vector<2x64x32xf32>
    %cst_16 = arith.constant 0.000000e+00 : f32
    %24 = vector.broadcast %cst_16 : f32 to vector<2x64x32xf32>
    %25 = arith.maximumf %23, %24 : vector<2x64x32xf32>
    %26 = vector.shape_cast %25 : vector<2x64x32xf32> to vector<128x32xf32>
    %27 = arith.truncf %26 : vector<128x32xf32> to vector<128x32xbf16>
    %c0_17 = arith.constant 0 : index
    %c0_18 = arith.constant 0 : index
    %28 = vector.load %arg7[%c0_17, %c0_18] : memref<32x16xbf16, #tpu.memory_space<vmem>>, vector<32x16xbf16>
    %cst_19 = arith.constant dense<0.000000e+00> : vector<128x16xf32>
    %29 = tpu.matmul %27, %28, %cst_19 {dimension_numbers = #tpu.dot_dimension_numbers<[1], [0], [0], [1], [0, 0, 1, 1], [], []>} : vector<128x32xbf16>, vector<32x16xbf16>, vector<128x16xf32> -> vector<128x16xf32>
    %c1 = arith.constant 1 : index
    %c0_20 = arith.constant 0 : index
    %30 = vector.load %arg5[%c1, %c0_20] : memref<2x16xf32, #tpu.memory_space<vmem>>, vector<1x16xf32>
    %31 = vector.broadcast %30 : vector<1x16xf32> to vector<128x16xf32>
    %32 = arith.addf %29, %31 : vector<128x16xf32>
    %cst_21 = arith.constant 0.000000e+00 : f32
    %33 = vector.broadcast %cst_21 : f32 to vector<128x16xf32>
    %34 = arith.maximumf %32, %33 : vector<128x16xf32>
    %35 = arith.truncf %34 : vector<128x16xf32> to vector<128x16xbf16>
    %c0_22 = arith.constant 0 : index
    %c0_23 = arith.constant 0 : index
    %36 = vector.load %arg8[%c0_22, %c0_23] : memref<16x3xbf16, #tpu.memory_space<vmem>>, vector<16x3xbf16>
    %cst_24 = arith.constant dense<0.000000e+00> : vector<128x3xf32>
    %37 = tpu.matmul %35, %36, %cst_24 {dimension_numbers = #tpu.dot_dimension_numbers<[1], [0], [0], [1], [0, 0, 1, 1], [], []>} : vector<128x16xbf16>, vector<16x3xbf16>, vector<128x3xf32> -> vector<128x3xf32>
    %c0_25 = arith.constant 0 : index
    %c0_26 = arith.constant 0 : index
    %38 = vector.load %arg9[%c0_25, %c0_26] : memref<1x3xf32, #tpu.memory_space<vmem>>, vector<1x3xf32>
    %39 = vector.broadcast %38 : vector<1x3xf32> to vector<128x3xf32>
    %40 = arith.addf %37, %39 : vector<128x3xf32>
    %41 = vector.shape_cast %40 : vector<128x3xf32> to vector<2x64x3xf32>
    %42 = tpu.transpose %41, [0, 2, 1] : vector<2x64x3xf32> -> vector<2x3x64xf32>
    %c0_27 = arith.constant 0 : index
    %c0_28 = arith.constant 0 : index
    %c0_29 = arith.constant 0 : index
    %43 = vector.load %arg10[%c0_27, %c0_28, %c0_29] : memref<2x3x64xf32, #tpu.memory_space<vmem>>, vector<2x3x64xf32>
    tpu.vector_store %arg10[%c0_27, %c0_28, %c0_29], %42 {strides = array<i32>} : memref<2x3x64xf32, #tpu.memory_space<vmem>>, vector<2x3x64xf32>,
    return
  }
  func.func @transform_0(%arg0: i32) -> (i32, i32) {
    %c0_i32 = arith.constant 0 : i32
    %c0_i32_0 = arith.constant 0 : i32
    %c0_i32_1 = arith.constant 0 : i32
    return %c0_i32, %c0_i32_0 : i32, i32
  }
  func.func @transform_1(%arg0: i32) -> (i32, i32, i32) {
    %c0_i32 = arith.constant 0 : i32
    %c0_i32_0 = arith.constant 0 : i32
    %c0_i32_1 = arith.constant 0 : i32
    return %arg0, %c0_i32, %c0_i32_0 : i32, i32, i32
  }
  func.func @transform_2(%arg0: i32) -> (i32, i32, i32) {
    %c0_i32 = arith.constant 0 : i32
    %c0_i32_0 = arith.constant 0 : i32
    %c0_i32_1 = arith.constant 0 : i32
    return %arg0, %c0_i32, %c0_i32_0 : i32, i32, i32
  }
  func.func @transform_3(%arg0: i32) -> (i32, i32) {
    %c0_i32 = arith.constant 0 : i32
    %c0_i32_0 = arith.constant 0 : i32
    %c0_i32_1 = arith.constant 0 : i32
    return %c0_i32, %c0_i32_0 : i32, i32
  }
  func.func @transform_4(%arg0: i32) -> (i32, i32) {
    %c0_i32 = arith.constant 0 : i32
    %c0_i32_0 = arith.constant 0 : i32
    %c0_i32_1 = arith.constant 0 : i32
    return %c0_i32, %c0_i32_0 : i32, i32
  }
  func.func @transform_5(%arg0: i32) -> (i32, i32) {
    %c0_i32 = arith.constant 0 : i32
    %c0_i32_0 = arith.constant 0 : i32
    %c0_i32_1 = arith.constant 0 : i32
    return %c0_i32, %c0_i32_0 : i32, i32
  }
  func.func @transform_6(%arg0: i32) -> (i32, i32) {
    %c0_i32 = arith.constant 0 : i32
    %c0_i32_0 = arith.constant 0 : i32
    %c0_i32_1 = arith.constant 0 : i32
    return %c0_i32, %c0_i32_0 : i32, i32
  }
  func.func @transform_7(%arg0: i32) -> (i32, i32) {
    %c0_i32 = arith.constant 0 : i32
    %c0_i32_0 = arith.constant 0 : i32
    %c0_i32_1 = arith.constant 0 : i32
    return %c0_i32, %c0_i32_0 : i32, i32
  }
  func.func @transform_8(%arg0: i32) -> (i32, i32) {
    %c0_i32 = arith.constant 0 : i32
    %c0_i32_0 = arith.constant 0 : i32
    %c0_i32_1 = arith.constant 0 : i32
    return %c0_i32, %c0_i32_0 : i32, i32
  }
  func.func @transform_9(%arg0: i32) -> (i32, i32, i32) {
    %c0_i32 = arith.constant 0 : i32
    %c0_i32_0 = arith.constant 0 : i32
    %c0_i32_1 = arith.constant 0 : i32
    return %arg0, %c0_i32, %c0_i32_0 : i32, i32, i32
  }
}

</mosaic_0001>

<llo_original>
// kernel: fold_forward.1
$region0: #{fold_forward.1}
  #allocation0 [shape = 'u32[]', space=smem, size = 0x4, offset = 0x4, fixed_abs, tag = 'smem constant byte address 0x4 - core index']
  #allocation1 [shape = 'u32[144,128]{1,0:T(1,128)}', space=vmem, size = 0x12000, scoped, tag = 'internal scratch']
  %s0 = inlined_call_operand.vmem [shape: f32[64,32], index: 0, kind: input, shape index: {}]
  %s1 = inlined_call_operand.vmem [shape: f32[2,1,32], index: 1, kind: input, shape index: {}]
  %s2 = inlined_call_operand.vmem [shape: f32[2,1,32], index: 2, kind: input, shape index: {}]
  %s3 = inlined_call_operand.vmem [shape: bf16[32,16], index: 3, kind: input, shape index: {}]
  %s4 = inlined_call_operand.vmem [shape: f32[2,16], index: 4, kind: input, shape index: {}]
  %s5 = inlined_call_operand.vmem [shape: bf16[16,32], index: 5, kind: input, shape index: {}]
  %s6 = inlined_call_operand.vmem [shape: bf16[32,16], index: 6, kind: input, shape index: {}]
  %s7 = inlined_call_operand.vmem [shape: bf16[16,3], index: 7, kind: input, shape index: {}]
  %s8 = inlined_call_operand.vmem [shape: f32[1,3], index: 8, kind: input, shape index: {}]
  %s9 = inlined_call_operand.vmem [shape: f32[2,3,64], index: 9, kind: output, shape index: {}]
  %s10 = sld [smem:[#allocation0]]
  $region46: #{fold_forward.1} parent=0
    _
  %s12 = ssub.s32 1, %s10
  %s13 = scalar_select 0, %s12, %s10
  // Predicated region
  $region2: #{fold_forward.1} parent=0 // pred_check
    _
  $region3: #{fold_forward.1} parent=0 // pred_check_branch
    %15 = sbr.rel (0) target = $region5
  $region4: #{fold_forward.1} parent=0 // pred_region
    _
  $region5: #{fold_forward.1} parent=0 // pred_fallthru
    _
  // Predicated region
  $region6: #{fold_forward.1} parent=0 // pred_check
    _
  $region7: #{fold_forward.1} parent=0 // pred_check_branch
    %17 = sbr.rel (0) target = $region9
  $region8: #{fold_forward.1} parent=0 // pred_region
    _
  $region9: #{fold_forward.1} parent=0 // pred_fallthru
    _
  // Predicated region
  $region10: #{fold_forward.1} parent=0 // pred_check
    _
  $region11: #{fold_forward.1} parent=0 // pred_check_branch
    %19 = sbr.rel (0) target = $region13
  $region12: #{fold_forward.1} parent=0 // pred_region
    _
  $region13: #{fold_forward.1} parent=0 // pred_fallthru
    _
  // Predicated region
  $region14: #{fold_forward.1} parent=0 // pred_check
    _
  $region15: #{fold_forward.1} parent=0 // pred_check_branch
    %21 = sbr.rel (0) target = $region17
  $region16: #{fold_forward.1} parent=0 // pred_region
    _
  $region17: #{fold_forward.1} parent=0 // pred_fallthru
    _
  // Predicated region
  $region18: #{fold_forward.1} parent=0 // pred_check
    _
  $region19: #{fold_forward.1} parent=0 // pred_check_branch
    %23 = sbr.rel (0) target = $region21
  $region20: #{fold_forward.1} parent=0 // pred_region
    _
  $region21: #{fold_forward.1} parent=0 // pred_fallthru
    _
  // Predicated region
  $region22: #{fold_forward.1} parent=0 // pred_check
    _
  $region23: #{fold_forward.1} parent=0 // pred_check_branch
    %25 = sbr.rel (0) target = $region25
  $region24: #{fold_forward.1} parent=0 // pred_region
    _
  $region25: #{fold_forward.1} parent=0 // pred_fallthru
    _
  // Predicated region
  $region26: #{fold_forward.1} parent=0 // pred_check
    _
  $region27: #{fold_forward.1} parent=0 // pred_check_branch
    %27 = sbr.rel (0) target = $region29
  $region28: #{fold_forward.1} parent=0 // pred_region
    _
  $region29: #{fold_forward.1} parent=0 // pred_fallthru
    _
  // Predicated region
  $region30: #{fold_forward.1} parent=0 // pred_check
    _
  $region31: #{fold_forward.1} parent=0 // pred_check_branch
    %29 = sbr.rel (0) target = $region33
  $region32: #{fold_forward.1} parent=0 // pred_region
    _
  $region33: #{fold_forward.1} parent=0 // pred_fallthru
    _
  // Predicated region
  $region34: #{fold_forward.1} parent=0 // pred_check
    _
  $region35: #{fold_forward.1} parent=0 // pred_check_branch
    %31 = sbr.rel (0) target = $region37
  $region36: #{fold_forward.1} parent=0 // pred_region
    _
  $region37: #{fold_forward.1} parent=0 // pred_fallthru
    _
  %v33 = vld [vmem:[%s0] sm:$0xff]
  %v34 = vld [vmem:[%s0 + $0x8] sm:$0xff]
  %v35 = vld [vmem:[%s0 + $0x10] sm:$0xff]
  %v36 = vld [vmem:[%s0 + $0x18] sm:$0xff]
  %v37 = vld [vmem:[%s0 + $0x20] sm:$0xff]
  %v38 = vld [vmem:[%s0 + $0x28] sm:$0xff]
  %v39 = vld [vmem:[%s0 + $0x30] sm:$0xff]
  %v40 = vld [vmem:[%s0 + $0x38] sm:$0xff]
  %v41 = vld [vmem:[%s1] sm:$0x1]
  %v42 = vld [vmem:[%s1 + $0x1] sm:$0x1]
  %v43 = vld [vmem:[%s2] sm:$0x1]
  %v44 = vld [vmem:[%s2 + $0x1] sm:$0x1]
  %v47 = vlaneseq
  %v48 = vshrl.u32 %v47, 7
  %v49 = vsub.s32 0, %v48
  %v50 = vrot.slane %v41, %v49
  %v51 = vlaneseq
  %v52 = vshrl.u32 %v51, 7
  %v53 = vsub.s32 0, %v52
  %v54 = vrot.slane %v42, %v53
  %v57 = vadd.f32 %v33, %v50
  %v58 = vadd.f32 %v34, %v50
  %v59 = vadd.f32 %v35, %v50
  %v60 = vadd.f32 %v36, %v50
  %v61 = vadd.f32 %v37, %v50
  %v62 = vadd.f32 %v38, %v50
  %v63 = vadd.f32 %v39, %v50
  %v64 = vadd.f32 %v40, %v50
  %v65 = vadd.f32 %v33, %v54
  %v66 = vadd.f32 %v34, %v54
  %v67 = vadd.f32 %v35, %v54
  %v68 = vadd.f32 %v36, %v54
  %v69 = vadd.f32 %v37, %v54
  %v70 = vadd.f32 %v38, %v54
  %v71 = vadd.f32 %v39, %v54
  %v72 = vadd.f32 %v40, %v54
  %v73 = vmax.f32 %v57, 0.0
  %v74 = vmax.f32 %v58, 0.0
  %v75 = vmax.f32 %v59, 0.0
  %v76 = vmax.f32 %v60, 0.0
  %v77 = vmax.f32 %v61, 0.0
  %v78 = vmax.f32 %v62, 0.0
  %v79 = vmax.f32 %v63, 0.0
  %v80 = vmax.f32 %v64, 0.0
  %v81 = vmax.f32 %v65, 0.0
  %v82 = vmax.f32 %v66, 0.0
  %v83 = vmax.f32 %v67, 0.0
  %v84 = vmax.f32 %v68, 0.0
  %v85 = vmax.f32 %v69, 0.0
  %v86 = vmax.f32 %v70, 0.0
  %v87 = vmax.f32 %v71, 0.0
  %v88 = vmax.f32 %v72, 0.0
  %v89 = vpack.c.bf16 %v74, %v73
  %v90 = vpack.c.bf16 %v76, %v75
  %v91 = vpack.c.bf16 %v78, %v77
  %v92 = vpack.c.bf16 %v80, %v79
  %v93 = vpack.c.bf16 %v82, %v81
  %v94 = vpack.c.bf16 %v84, %v83
  %v95 = vpack.c.bf16 %v86, %v85
  %v96 = vpack.c.bf16 %v88, %v87
  %v97 = vld [vmem:[%s3] sm:$0xf]
  %v98 = vld [vmem:[%s3 + $0x4] sm:$0xf]
  %v99 = vld [vmem:[%s3 + $0x8] sm:$0xf]
  %v100 = vld [vmem:[%s3 + $0xc] sm:$0xf]
  %v101 = vld [vmem:[%s4] sm:$0x1]
  %v102 = vlaneseq
  %v103 = vshrl.u32 %v102, 7
  %v104 = vsub.s32 0, %v103
  %v105 = vrot.slane %v101, %v104
  %v110 = vunpack.c.l.b16 %v97
  %v111 = vunpack.c.l.b16 %v98
  %v112 = vunpack.c.l.b16 %v99
  %v113 = vunpack.c.l.b16 %v100
  %v114 = vpack.c.b16 %v111, %v110
  %v115 = vpack.c.b16 %v113, %v112
  %vm118 = vcmask 261120
  %v120 = vsel %vm118, %v89, 0
  %v123 = vsel %vm118, %v90, 0
  %v126 = vsel %vm118, %v91, 0
  %v129 = vsel %vm118, %v92, 0
  %v132 = vsel %vm118, %v93, 0
  %v135 = vsel %vm118, %v94, 0
  %v138 = vsel %vm118, %v95, 0
  %v141 = vsel %vm118, %v96, 0
  %143 = vmatprep.subr.bf16.mxu0 0
  %144 = vmatpush1.bf16.msra.mxu0 %v114
  %145 = vmatprep.subr.bf16.mxu0 0
  %146 = vmatpush1.bf16.msra.mxu0 %v115
  %147 = vmatprep.subr.bf16.mxu0 0
  %148 = vmatpush1.bf16.msra.mxu0 0
  %149 = vmatprep.subr.bf16.mxu0 0
  %150 = vmatpush1.bf16.msra.mxu0 0
  %151 = vmatprep.subr.bf16.mxu0 0
  %152 = vmatpush1.bf16.msra.mxu0 0
  %153 = vmatprep.subr.bf16.mxu0 0
  %154 = vmatpush1.bf16.msra.mxu0 0
  %155 = vmatprep.subr.bf16.mxu0 0
  %156 = vmatpush1.bf16.msra.mxu0 0
  %157 = vmatprep.subr.bf16.mxu0 0
  %158 = vmatpush1.bf16.msra.mxu0 0
  %159 = vmatprep.subr.bf16.mxu0 0
  %160 = vmatpush1.bf16.msra.mxu0 0
  %161 = vmatprep.subr.bf16.mxu0 0
  %162 = vmatpush1.bf16.msra.mxu0 0
  %163 = vmatprep.subr.bf16.mxu0 0
  %164 = vmatpush1.bf16.msra.mxu0 0
  %165 = vmatprep.subr.bf16.mxu0 0
  %166 = vmatpush1.bf16.msra.mxu0 0
  %167 = vmatprep.subr.bf16.mxu0 0
  %168 = vmatpush1.bf16.msra.mxu0 0
  %169 = vmatprep.subr.bf16.mxu0 0
  %170 = vmatpush1.bf16.msra.mxu0 0
  %171 = vmatprep.subr.bf16.mxu0 0
  %172 = vmatpush1.bf16.msra.mxu0 0
  %173 = vmatprep.subr.bf16.mxu0 0
  %174 = vmatpush1.bf16.msra.mxu0 0
  %175 = vmatprep.mubr.bf16.mxu0 0
  %176 = vmatmul.mubr.bf16.gmra.mrb[0].mxu0 %v120
  %v177 = vpop.f32.mrb[0].mxu0
  %v178 = vadd.f32 %v105, %v177
  %v179 = vpop.f32.mrb[0].mxu0
  %v180 = vpop.f32.mrb[0].mxu0
  %v181 = vadd.f32 %v105, %v180
  %v182 = vpop.f32.mrb[0].mxu0
  %183 = vmatprep.mubr.bf16.mxu0 0
  %184 = vmatmul.mubr.bf16.gmra.mrb[0].mxu0 %v123
  %v185 = vpop.f32.mrb[0].mxu0
  %v186 = vadd.f32 %v105, %v185
  %v187 = vpop.f32.mrb[0].mxu0
  %v188 = vpop.f32.mrb[0].mxu0
  %v189 = vadd.f32 %v105, %v188
  %v190 = vpop.f32.mrb[0].mxu0
  %191 = vmatprep.mubr.bf16.mxu0 0
  %192 = vmatmul.mubr.bf16.gmra.mrb[0].mxu0 %v126
  %v193 = vpop.f32.mrb[0].mxu0
  %v194 = vadd.f32 %v105, %v193
  %v195 = vpop.f32.mrb[0].mxu0
  %v196 = vpop.f32.mrb[0].mxu0
  %v197 = vadd.f32 %v105, %v196
  %v198 = vpop.f32.mrb[0].mxu0
  %199 = vmatprep.mubr.bf16.mxu0 0
  %200 = vmatmul.mubr.bf16.gmra.mrb[0].mxu0 %v129
  %v201 = vpop.f32.mrb[0].mxu0
  %v202 = vadd.f32 %v105, %v201
  %v203 = vpop.f32.mrb[0].mxu0
  %v204 = vpop.f32.mrb[0].mxu0
  %v205 = vadd.f32 %v105, %v204
  %v206 = vpop.f32.mrb[0].mxu0
  %207 = vmatprep.mubr.bf16.mxu0 0
  %208 = vmatmul.mubr.bf16.gmra.mrb[0].mxu0 %v132
  %v209 = vpop.f32.mrb[0].mxu0
  %v210 = vadd.f32 %v105, %v209
  %v211 = vpop.f32.mrb[0].mxu0
  %v212 = vpop.f32.mrb[0].mxu0
  %v213 = vadd.f32 %v105, %v212
  %v214 = vpop.f32.mrb[0].mxu0
  %215 = vmatprep.mubr.bf16.mxu0 0
  %216 = vmatmul.mubr.bf16.gmra.mrb[0].mxu0 %v135
  %v217 = vpop.f32.mrb[0].mxu0
  %v218 = vadd.f32 %v105, %v217
  %v219 = vpop.f32.mrb[0].mxu0
  %v220 = vpop.f32.mrb[0].mxu0
  %v221 = vadd.f32 %v105, %v220
  %v222 = vpop.f32.mrb[0].mxu0
  %223 = vmatprep.mubr.bf16.mxu0 0
  %224 = vmatmul.mubr.bf16.gmra.mrb[0].mxu0 %v138
  %v225 = vpop.f32.mrb[0].mxu0
  %v226 = vadd.f32 %v105, %v225
  %v227 = vpop.f32.mrb[0].mxu0
  %v228 = vpop.f32.mrb[0].mxu0
  %v229 = vadd.f32 %v105, %v228
  %v230 = vpop.f32.mrb[0].mxu0
  %231 = vmatprep.mubr.bf16.mxu0 0
  %232 = vmatmul.mubr.bf16.gmra.mrb[0].mxu0 %v141
  %v233 = vpop.f32.mrb[0].mxu0
  %v234 = vadd.f32 %v105, %v233
  %v235 = vpop.f32.mrb[0].mxu0
  %v236 = vpop.f32.mrb[0].mxu0
  %v237 = vadd.f32 %v105, %v236
  %v238 = vpop.f32.mrb[0].mxu0
  %239 = vdwg.mxu0
  %v240 = vmax.f32 %v178, 0.0
  %v241 = vmax.f32 %v181, 0.0
  %v242 = vmax.f32 %v186, 0.0
  %v243 = vmax.f32 %v189, 0.0
  %v244 = vmax.f32 %v194, 0.0
  %v245 = vmax.f32 %v197, 0.0
  %v246 = vmax.f32 %v202, 0.0
  %v247 = vmax.f32 %v205, 0.0
  %v248 = vmax.f32 %v210, 0.0
  %v249 = vmax.f32 %v213, 0.0
  %v250 = vmax.f32 %v218, 0.0
  %v251 = vmax.f32 %v221, 0.0
  %v252 = vmax.f32 %v226, 0.0
  %v253 = vmax.f32 %v229, 0.0
  %v254 = vmax.f32 %v234, 0.0
  %v255 = vmax.f32 %v237, 0.0
  %v256 = vpack.c.bf16 %v241, %v240
  %v257 = vpack.c.bf16 %v243, %v242
  %v258 = vpack.c.bf16 %v245, %v244
  %v259 = vpack.c.bf16 %v247, %v246
  %v260 = vpack.c.bf16 %v249, %v248
  %v261 = vpack.c.bf16 %v251, %v250
  %v262 = vpack.c.bf16 %v253, %v252
  %v263 = vpack.c.bf16 %v255, %v254
  %v264 = vld [vmem:[%s5] sm:$0xf]
  %v265 = vld [vmem:[%s5 + $0x4] sm:$0xf]
  %v268 = vunpack.c.l.b16 %v264
  %v269 = vunpack.c.l.b16 %v265
  %v270 = vpack.c.b16 %v269, %v268
  %vm272 = vcmask 130048
  %v274 = vsel %vm272, %v256, 0
  %v277 = vsel %vm272, %v257, 0
  %v280 = vsel %vm272, %v258, 0
  %v283 = vsel %vm272, %v259, 0
  %v286 = vsel %vm272, %v260, 0
  %v289 = vsel %vm272, %v261, 0
  %v292 = vsel %vm272, %v262, 0
  %v295 = vsel %vm272, %v263, 0
  %297 = vmatprep.subr.bf16.mxu0 0
  %298 = vmatpush1.bf16.msra.mxu0 %v270
  %299 = vmatprep.subr.bf16.mxu0 0
  %300 = vmatpush1.bf16.msra.mxu0 0
  %301 = vmatprep.subr.bf16.mxu0 0
  %302 = vmatpush1.bf16.msra.mxu0 0
  %303 = vmatprep.subr.bf16.mxu0 0
  %304 = vmatpush1.bf16.msra.mxu0 0
  %305 = vmatprep.subr.bf16.mxu0 0
  %306 = vmatpush1.bf16.msra.mxu0 0
  %307 = vmatprep.subr.bf16.mxu0 0
  %308 = vmatpush1.bf16.msra.mxu0 0
  %309 = vmatprep.subr.bf16.mxu0 0
  %310 = vmatpush1.bf16.msra.mxu0 0
  %311 = vmatprep.subr.bf16.mxu0 0
  %312 = vmatpush1.bf16.msra.mxu0 0
  %313 = vmatprep.subr.bf16.mxu0 0
  %314 = vmatpush1.bf16.msra.mxu0 0
  %315 = vmatprep.subr.bf16.mxu0 0
  %316 = vmatpush1.bf16.msra.mxu0 0
  %317 = vmatprep.subr.bf16.mxu0 0
  %318 = vmatpush1.bf16.msra.mxu0 0
  %319 = vmatprep.subr.bf16.mxu0 0
  %320 = vmatpush1.bf16.msra.mxu0 0
  %321 = vmatprep.subr.bf16.mxu0 0
  %322 = vmatpush1.bf16.msra.mxu0 0
  %323 = vmatprep.subr.bf16.mxu0 0
  %324 = vmatpush1.bf16.msra.mxu0 0
  %325 = vmatprep.subr.bf16.mxu0 0
  %326 = vmatpush1.bf16.msra.mxu0 0
  %327 = vmatprep.subr.bf16.mxu0 0
  %328 = vmatpush1.bf16.msra.mxu0 0
  %329 = vmatprep.mubr.bf16.mxu0 0
  %330 = vmatmul.mubr.bf16.gmra.mrb[0].mxu0 %v274
  %v331 = vpop.f32.mrb[0].mxu0
  %v332 = vadd.f32 0.0, %v331
  %v333 = vpop.f32.mrb[0].mxu0
  %v334 = vpop.f32.mrb[0].mxu0
  %v335 = vadd.f32 0.0, %v334
  %v336 = vpop.f32.mrb[0].mxu0
  %337 = vmatprep.mubr.bf16.mxu0 0
  %338 = vmatmul.mubr.bf16.gmra.mrb[0].mxu0 %v277
  %v339 = vpop.f32.mrb[0].mxu0
  %v340 = vadd.f32 0.0, %v339
  %v341 = vpop.f32.mrb[0].mxu0
  %v342 = vpop.f32.mrb[0].mxu0
  %v343 = vadd.f32 0.0, %v342
  %v344 = vpop.f32.mrb[0].mxu0
  %345 = vmatprep.mubr.bf16.mxu0 0
  %346 = vmatmul.mubr.bf16.gmra.mrb[0].mxu0 %v280
  %v347 = vpop.f32.mrb[0].mxu0
  %v348 = vadd.f32 0.0, %v347
  %v349 = vpop.f32.mrb[0].mxu0
  %v350 = vpop.f32.mrb[0].mxu0
  %v351 = vadd.f32 0.0, %v350
  %v352 = vpop.f32.mrb[0].mxu0
  %353 = vmatprep.mubr.bf16.mxu0 0
  %354 = vmatmul.mubr.bf16.gmra.mrb[0].mxu0 %v283
  %v355 = vpop.f32.mrb[0].mxu0
  %v356 = vadd.f32 0.0, %v355
  %v357 = vpop.f32.mrb[0].mxu0
  %v358 = vpop.f32.mrb[0].mxu0
  %v359 = vadd.f32 0.0, %v358
  %v360 = vpop.f32.mrb[0].mxu0
  %361 = vmatprep.mubr.bf16.mxu0 0
  %362 = vmatmul.mubr.bf16.gmra.mrb[0].mxu0 %v286
  %v363 = vpop.f32.mrb[0].mxu0
  %v364 = vadd.f32 0.0, %v363
  %v365 = vpop.f32.mrb[0].mxu0
  %v366 = vpop.f32.mrb[0].mxu0
  %v367 = vadd.f32 0.0, %v366
  %v368 = vpop.f32.mrb[0].mxu0
  %369 = vmatprep.mubr.bf16.mxu0 0
  %370 = vmatmul.mubr.bf16.gmra.mrb[0].mxu0 %v289
  %v371 = vpop.f32.mrb[0].mxu0
  %v372 = vadd.f32 0.0, %v371
  %v373 = vpop.f32.mrb[0].mxu0
  %v374 = vpop.f32.mrb[0].mxu0
  %v375 = vadd.f32 0.0, %v374
  %v376 = vpop.f32.mrb[0].mxu0
  %377 = vmatprep.mubr.bf16.mxu0 0
  %378 = vmatmul.mubr.bf16.gmra.mrb[0].mxu0 %v292
  %v379 = vpop.f32.mrb[0].mxu0
  %v380 = vadd.f32 0.0, %v379
  %v381 = vpop.f32.mrb[0].mxu0
  %v382 = vpop.f32.mrb[0].mxu0
  %v383 = vadd.f32 0.0, %v382
  %v384 = vpop.f32.mrb[0].mxu0
  %385 = vmatprep.mubr.bf16.mxu0 0
  %386 = vmatmul.mubr.bf16.gmra.mrb[0].mxu0 %v295
  %v387 = vpop.f32.mrb[0].mxu0
  %v388 = vadd.f32 0.0, %v387
  %v389 = vpop.f32.mrb[0].mxu0
  %v390 = vpop.f32.mrb[0].mxu0
  %v391 = vadd.f32 0.0, %v390
  %v392 = vpop.f32.mrb[0].mxu0
  %393 = vdwg.mxu0
  %v396 = vlaneseq
  %v397 = vshrl.u32 %v396, 7
  %v398 = vsub.s32 0, %v397
  %v399 = vrot.slane %v43, %v398
  %v400 = vlaneseq
  %v401 = vshrl.u32 %v400, 7
  %v402 = vsub.s32 0, %v401
  %v403 = vrot.slane %v44, %v402
  %v406 = vadd.f32 %v332, %v399
  %v407 = vadd.f32 %v335, %v399
  %v408 = vadd.f32 %v340, %v399
  %v409 = vadd.f32 %v343, %v399
  %v410 = vadd.f32 %v348, %v399
  %v411 = vadd.f32 %v351, %v399
  %v412 = vadd.f32 %v356, %v399
  %v413 = vadd.f32 %v359, %v399
  %v414 = vadd.f32 %v364, %v403
  %v415 = vadd.f32 %v367, %v403
  %v416 = vadd.f32 %v372, %v403
  %v417 = vadd.f32 %v375, %v403
  %v418 = vadd.f32 %v380, %v403
  %v419 = vadd.f32 %v383, %v403
  %v420 = vadd.f32 %v388, %v403
  %v421 = vadd.f32 %v391, %v403
  %v422 = vmax.f32 %v406, 0.0
  %v423 = vmax.f32 %v407, 0.0
  %v424 = vmax.f32 %v408, 0.0
  %v425 = vmax.f32 %v409, 0.0
  %v426 = vmax.f32 %v410, 0.0
  %v427 = vmax.f32 %v411, 0.0
  %v428 = vmax.f32 %v412, 0.0
  %v429 = vmax.f32 %v413, 0.0
  %v430 = vmax.f32 %v414, 0.0
  %v431 = vmax.f32 %v415, 0.0
  %v432 = vmax.f32 %v416, 0.0
  %v433 = vmax.f32 %v417, 0.0
  %v434 = vmax.f32 %v418, 0.0
  %v435 = vmax.f32 %v419, 0.0
  %v436 = vmax.f32 %v420, 0.0
  %v437 = vmax.f32 %v421, 0.0
  %v438 = vpack.c.bf16 %v423, %v422
  %v439 = vpack.c.bf16 %v425, %v424
  %v440 = vpack.c.bf16 %v427, %v426
  %v441 = vpack.c.bf16 %v429, %v428
  %v442 = vpack.c.bf16 %v431, %v430
  %v443 = vpack.c.bf16 %v433, %v432
  %v444 = vpack.c.bf16 %v435, %v434
  %v445 = vpack.c.bf16 %v437, %v436
  %v446 = vld [vmem:[%s6] sm:$0xf]
  %v447 = vld [vmem:[%s6 + $0x4] sm:$0xf]
  %v448 = vld [vmem:[%s6 + $0x8] sm:$0xf]
  %v449 = vld [vmem:[%s6 + $0xc] sm:$0xf]
  %v450 = vld [vmem:[%s4 + $0x1] sm:$0x1]
  %v451 = vlaneseq
  %v452 = vshrl.u32 %v451, 7
  %v453 = vsub.s32 0, %v452
  %v454 = vrot.slane %v450, %v453
  %v459 = vunpack.c.l.b16 %v446
  %v460 = vunpack.c.l.b16 %v447
  %v461 = vunpack.c.l.b16 %v448
  %v462 = vunpack.c.l.b16 %v449
  %v463 = vpack.c.b16 %v460, %v459
  %v464 = vpack.c.b16 %v462, %v461
  %v468 = vsel %vm118, %v438, 0
  %v471 = vsel %vm118, %v439, 0
  %v474 = vsel %vm118, %v440, 0
  %v477 = vsel %vm118, %v441, 0
  %v480 = vsel %vm118, %v442, 0
  %v483 = vsel %vm118, %v443, 0
  %v486 = vsel %vm118, %v444, 0
  %v489 = vsel %vm118, %v445, 0
  %491 = vmatprep.subr.bf16.mxu0 0
  %492 = vmatpush1.bf16.msra.mxu0 %v463
  %493 = vmatprep.subr.bf16.mxu0 0
  %494 = vmatpush1.bf16.msra.mxu0 %v464
  %495 = vmatprep.subr.bf16.mxu0 0
  %496 = vmatpush1.bf16.msra.mxu0 0
  %497 = vmatprep.subr.bf16.mxu0 0
  %498 = vmatpush1.bf16.msra.mxu0 0
  %499 = vmatprep.subr.bf16.mxu0 0
  %500 = vmatpush1.bf16.msra.mxu0 0
  %501 = vmatprep.subr.bf16.mxu0 0
  %502 = vmatpush1.bf16.msra.mxu0 0
  %503 = vmatprep.subr.bf16.mxu0 0
  %504 = vmatpush1.bf16.msra.mxu0 0
  %505 = vmatprep.subr.bf16.mxu0 0
  %506 = vmatpush1.bf16.msra.mxu0 0
  %507 = vmatprep.subr.bf16.mxu0 0
  %508 = vmatpush1.bf16.msra.mxu0 0
  %509 = vmatprep.subr.bf16.mxu0 0
  %510 = vmatpush1.bf16.msra.mxu0 0
  %511 = vmatprep.subr.bf16.mxu0 0
  %512 = vmatpush1.bf16.msra.mxu0 0
  %513 = vmatprep.subr.bf16.mxu0 0
  %514 = vmatpush1.bf16.msra.mxu0 0
  %515 = vmatprep.subr.bf16.mxu0 0
  %516 = vmatpush1.bf16.msra.mxu0 0
  %517 = vmatprep.subr.bf16.mxu0 0
  %518 = vmatpush1.bf16.msra.mxu0 0
  %519 = vmatprep.subr.bf16.mxu0 0
  %520 = vmatpush1.bf16.msra.mxu0 0
  %521 = vmatprep.subr.bf16.mxu0 0
  %522 = vmatpush1.bf16.msra.mxu0 0
  %523 = vmatprep.mubr.bf16.mxu0 0
  %524 = vmatmul.mubr.bf16.gmra.mrb[0].mxu0 %v468
  %v525 = vpop.f32.mrb[0].mxu0
  %v526 = vadd.f32 %v454, %v525
  %v527 = vpop.f32.mrb[0].mxu0
  %v528 = vpop.f32.mrb[0].mxu0
  %v529 = vadd.f32 %v454, %v528
  %v530 = vpop.f32.mrb[0].mxu0
  %531 = vmatprep.mubr.bf16.mxu0 0
  %532 = vmatmul.mubr.bf16.gmra.mrb[0].mxu0 %v471
  %v533 = vpop.f32.mrb[0].mxu0
  %v534 = vadd.f32 %v454, %v533
  %v535 = vpop.f32.mrb[0].mxu0
  %v536 = vpop.f32.mrb[0].mxu0
  %v537 = vadd.f32 %v454, %v536
  %v538 = vpop.f32.mrb[0].mxu0
  %539 = vmatprep.mubr.bf16.mxu0 0
  %540 = vmatmul.mubr.bf16.gmra.mrb[0].mxu0 %v474
  %v541 = vpop.f32.mrb[0].mxu0
  %v542 = vadd.f32 %v454, %v541
  %v543 = vpop.f32.mrb[0].mxu0
  %v544 = vpop.f32.mrb[0].mxu0
  %v545 = vadd.f32 %v454, %v544
  %v546 = vpop.f32.mrb[0].mxu0
  %547 = vmatprep.mubr.bf16.mxu0 0
  %548 = vmatmul.mubr.bf16.gmra.mrb[0].mxu0 %v477
  %v549 = vpop.f32.mrb[0].mxu0
  %v550 = vadd.f32 %v454, %v549
  %v551 = vpop.f32.mrb[0].mxu0
  %v552 = vpop.f32.mrb[0].mxu0
  %v553 = vadd.f32 %v454, %v552
  %v554 = vpop.f32.mrb[0].mxu0
  %555 = vmatprep.mubr.bf16.mxu0 0
  %556 = vmatmul.mubr.bf16.gmra.mrb[0].mxu0 %v480
  %v557 = vpop.f32.mrb[0].mxu0
  %v558 = vadd.f32 %v454, %v557
  %v559 = vpop.f32.mrb[0].mxu0
  %v560 = vpop.f32.mrb[0].mxu0
  %v561 = vadd.f32 %v454, %v560
  %v562 = vpop.f32.mrb[0].mxu0
  %563 = vmatprep.mubr.bf16.mxu0 0
  %564 = vmatmul.mubr.bf16.gmra.mrb[0].mxu0 %v483
  %v565 = vpop.f32.mrb[0].mxu0
  %v566 = vadd.f32 %v454, %v565
  %v567 = vpop.f32.mrb[0].mxu0
  %v568 = vpop.f32.mrb[0].mxu0
  %v569 = vadd.f32 %v454, %v568
  %v570 = vpop.f32.mrb[0].mxu0
  %571 = vmatprep.mubr.bf16.mxu0 0
  %572 = vmatmul.mubr.bf16.gmra.mrb[0].mxu0 %v486
  %v573 = vpop.f32.mrb[0].mxu0
  %v574 = vadd.f32 %v454, %v573
  %v575 = vpop.f32.mrb[0].mxu0
  %v576 = vpop.f32.mrb[0].mxu0
  %v577 = vadd.f32 %v454, %v576
  %v578 = vpop.f32.mrb[0].mxu0
  %579 = vmatprep.mubr.bf16.mxu0 0
  %580 = vmatmul.mubr.bf16.gmra.mrb[0].mxu0 %v489
  %v581 = vpop.f32.mrb[0].mxu0
  %v582 = vadd.f32 %v454, %v581
  %v583 = vpop.f32.mrb[0].mxu0
  %v584 = vpop.f32.mrb[0].mxu0
  %v585 = vadd.f32 %v454, %v584
  %v586 = vpop.f32.mrb[0].mxu0
  %587 = vdwg.mxu0
  %v588 = vmax.f32 %v526, 0.0
  %v589 = vmax.f32 %v529, 0.0
  %v590 = vmax.f32 %v534, 0.0
  %v591 = vmax.f32 %v537, 0.0
  %v592 = vmax.f32 %v542, 0.0
  %v593 = vmax.f32 %v545, 0.0
  %v594 = vmax.f32 %v550, 0.0
  %v595 = vmax.f32 %v553, 0.0
  %v596 = vmax.f32 %v558, 0.0
  %v597 = vmax.f32 %v561, 0.0
  %v598 = vmax.f32 %v566, 0.0
  %v599 = vmax.f32 %v569, 0.0
  %v600 = vmax.f32 %v574, 0.0
  %v601 = vmax.f32 %v577, 0.0
  %v602 = vmax.f32 %v582, 0.0
  %v603 = vmax.f32 %v585, 0.0
  %v604 = vpack.c.bf16 %v589, %v588
  %v605 = vpack.c.bf16 %v591, %v590
  %v606 = vpack.c.bf16 %v593, %v592
  %v607 = vpack.c.bf16 %v595, %v594
  %v608 = vpack.c.bf16 %v597, %v596
  %v609 = vpack.c.bf16 %v599, %v598
  %v610 = vpack.c.bf16 %v601, %v600
  %v611 = vpack.c.bf16 %v603, %v602
  %v612 = vld [vmem:[%s7] sm:$0xf]
  %v613 = vld [vmem:[%s7 + $0x4] sm:$0xf]
  %v614 = vld [vmem:[%s8] sm:$0x1]
  %v616 = vlaneseq
  %v617 = vshrl.u32 %v616, 7
  %v618 = vsub.s32 0, %v617
  %v619 = vrot.slane %v614, %v618
  %v623 = vunpack.c.l.b16 %v612
  %v624 = vunpack.c.l.b16 %v613
  %v625 = vpack.c.b16 %v624, %v623
  %v628 = vsel %vm272, %v604, 0
  %v631 = vsel %vm272, %v605, 0
  %v634 = vsel %vm272, %v606, 0
  %v637 = vsel %vm272, %v607, 0
  %v640 = vsel %vm272, %v608, 0
  %v643 = vsel %vm272, %v609, 0
  %v646 = vsel %vm272, %v610, 0
  %v649 = vsel %vm272, %v611, 0
  %651 = vmatprep.subr.bf16.mxu0 0
  %652 = vmatpush1.bf16.msra.mxu0 %v625
  %653 = vmatprep.subr.bf16.mxu0 0
  %654 = vmatpush1.bf16.msra.mxu0 0
  %655 = vmatprep.subr.bf16.mxu0 0
  %656 = vmatpush1.bf16.msra.mxu0 0
  %657 = vmatprep.subr.bf16.mxu0 0
  %658 = vmatpush1.bf16.msra.mxu0 0
  %659 = vmatprep.subr.bf16.mxu0 0
  %660 = vmatpush1.bf16.msra.mxu0 0
  %661 = vmatprep.subr.bf16.mxu0 0
  %662 = vmatpush1.bf16.msra.mxu0 0
  %663 = vmatprep.subr.bf16.mxu0 0
  %664 = vmatpush1.bf16.msra.mxu0 0
  %665 = vmatprep.subr.bf16.mxu0 0
  %666 = vmatpush1.bf16.msra.mxu0 0
  %667 = vmatprep.subr.bf16.mxu0 0
  %668 = vmatpush1.bf16.msra.mxu0 0
  %669 = vmatprep.subr.bf16.mxu0 0
  %670 = vmatpush1.bf16.msra.mxu0 0
  %671 = vmatprep.subr.bf16.mxu0 0
  %672 = vmatpush1.bf16.msra.mxu0 0
  %673 = vmatprep.subr.bf16.mxu0 0
  %674 = vmatpush1.bf16.msra.mxu0 0
  %675 = vmatprep.subr.bf16.mxu0 0
  %676 = vmatpush1.bf16.msra.mxu0 0
  %677 = vmatprep.subr.bf16.mxu0 0
  %678 = vmatpush1.bf16.msra.mxu0 0
  %679 = vmatprep.subr.bf16.mxu0 0
  %680 = vmatpush1.bf16.msra.mxu0 0
  %681 = vmatprep.subr.bf16.mxu0 0
  %682 = vmatpush1.bf16.msra.mxu0 0
  %683 = vmatprep.mubr.bf16.mxu0 0
  %684 = vmatmul.mubr.bf16.gmra.mrb[0].mxu0 %v628
  %v685 = vpop.f32.mrb[0].mxu0
  %v686 = vadd.f32 %v619, %v685
  %v687 = vpop.f32.mrb[0].mxu0
  %v688 = vpop.f32.mrb[0].mxu0
  %v689 = vadd.f32 %v619, %v688
  %v690 = vpop.f32.mrb[0].mxu0
  %691 = vmatprep.mubr.bf16.mxu0 0
  %692 = vmatmul.mubr.bf16.gmra.mrb[0].mxu0 %v631
  %v693 = vpop.f32.mrb[0].mxu0
  %v694 = vadd.f32 %v619, %v693
  %v695 = vpop.f32.mrb[0].mxu0
  %v696 = vpop.f32.mrb[0].mxu0
  %v697 = vadd.f32 %v619, %v696
  %v698 = vpop.f32.mrb[0].mxu0
  %699 = vmatprep.mubr.bf16.mxu0 0
  %700 = vmatmul.mubr.bf16.gmra.mrb[0].mxu0 %v634
  %v701 = vpop.f32.mrb[0].mxu0
  %v702 = vadd.f32 %v619, %v701
  %v703 = vpop.f32.mrb[0].mxu0
  %v704 = vpop.f32.mrb[0].mxu0
  %v705 = vadd.f32 %v619, %v704
  %v706 = vpop.f32.mrb[0].mxu0
  %707 = vmatprep.mubr.bf16.mxu0 0
  %708 = vmatmul.mubr.bf16.gmra.mrb[0].mxu0 %v637
  %v709 = vpop.f32.mrb[0].mxu0
  %v710 = vadd.f32 %v619, %v709
  %v711 = vpop.f32.mrb[0].mxu0
  %v712 = vpop.f32.mrb[0].mxu0
  %v713 = vadd.f32 %v619, %v712
  %v714 = vpop.f32.mrb[0].mxu0
  %715 = vmatprep.mubr.bf16.mxu0 0
  %716 = vmatmul.mubr.bf16.gmra.mrb[0].mxu0 %v640
  %v717 = vpop.f32.mrb[0].mxu0
  %v718 = vadd.f32 %v619, %v717
  %v719 = vpop.f32.mrb[0].mxu0
  %v720 = vpop.f32.mrb[0].mxu0
  %v721 = vadd.f32 %v619, %v720
  %v722 = vpop.f32.mrb[0].mxu0
  %723 = vmatprep.mubr.bf16.mxu0 0
  %724 = vmatmul.mubr.bf16.gmra.mrb[0].mxu0 %v643
  %v725 = vpop.f32.mrb[0].mxu0
  %v726 = vadd.f32 %v619, %v725
  %v727 = vpop.f32.mrb[0].mxu0
  %v728 = vpop.f32.mrb[0].mxu0
  %v729 = vadd.f32 %v619, %v728
  %v730 = vpop.f32.mrb[0].mxu0
  %731 = vmatprep.mubr.bf16.mxu0 0
  %732 = vmatmul.mubr.bf16.gmra.mrb[0].mxu0 %v646
  %v733 = vpop.f32.mrb[0].mxu0
  %v734 = vadd.f32 %v619, %v733
  %v735 = vpop.f32.mrb[0].mxu0
  %v736 = vpop.f32.mrb[0].mxu0
  %v737 = vadd.f32 %v619, %v736
  %v738 = vpop.f32.mrb[0].mxu0
  %739 = vmatprep.mubr.bf16.mxu0 0
  %740 = vmatmul.mubr.bf16.gmra.mrb[0].mxu0 %v649
  %v741 = vpop.f32.mrb[0].mxu0
  %v742 = vadd.f32 %v619, %v741
  %v743 = vpop.f32.mrb[0].mxu0
  %v744 = vpop.f32.mrb[0].mxu0
  %v745 = vadd.f32 %v619, %v744
  %v746 = vpop.f32.mrb[0].mxu0
  %747 = vdwg.mxu0
  %748 = vxpose.xlu0.b32.start [1/16] %v686, 128
  %749 = vxpose.xlu0.b32.cont [2/16] %v689, 128
  %750 = vxpose.xlu0.b32.cont [3/16] %v694, 128
  %751 = vxpose.xlu0.b32.cont [4/16] %v697, 128
  %752 = vxpose.xlu0.b32.cont [5/16] %v702, 128
  %753 = vxpose.xlu0.b32.cont [6/16] %v705, 128
  %754 = vxpose.xlu0.b32.cont [7/16] %v710, 128
  %755 = vxpose.xlu0.b32.cont [8/16] %v713, 128
  %756 = vxpose.xlu0.b32.cont [9/16] 0.0, 128
  %757 = vxpose.xlu0.b32.cont [10/16] 0.0, 128
  %758 = vxpose.xlu0.b32.cont [11/16] 0.0, 128
  %759 = vxpose.xlu0.b32.cont [12/16] 0.0, 128
  %760 = vxpose.xlu0.b32.cont [13/16] 0.0, 128
  %761 = vxpose.xlu0.b32.cont [14/16] 0.0, 128
  %762 = vxpose.xlu0.b32.cont [15/16] 0.0, 128
  %763 = vxpose.xlu0.b32.end [16/16] 0.0, 128
  %v764 = vpop.trf.xlu0
  %v765 = vpop.trf.xlu0
  %v766 = vpop.trf.xlu0
  %v767 = vpop.trf.xlu0
  %v768 = vpop.trf.xlu0
  %v769 = vpop.trf.xlu0
  %v770 = vpop.trf.xlu0
  %v771 = vpop.trf.xlu0
  %v772 = vpop.trf.xlu0
  %v773 = vpop.trf.xlu0
  %v774 = vpop.trf.xlu0
  %v775 = vpop.trf.xlu0
  %v776 = vpop.trf.xlu0
  %v777 = vpop.trf.xlu0
  %v778 = vpop.trf.xlu0
  %v779 = vpop.trf.xlu0
  %780 = vxpose.xlu0.b32.start [1/16] %v718, 128
  %781 = vxpose.xlu0.b32.cont [2/16] %v721, 128
  %782 = vxpose.xlu0.b32.cont [3/16] %v726, 128
  %783 = vxpose.xlu0.b32.cont [4/16] %v729, 128
  %784 = vxpose.xlu0.b32.cont [5/16] %v734, 128
  %785 = vxpose.xlu0.b32.cont [6/16] %v737, 128
  %786 = vxpose.xlu0.b32.cont [7/16] %v742, 128
  %787 = vxpose.xlu0.b32.cont [8/16] %v745, 128
  %788 = vxpose.xlu0.b32.cont [9/16] 0.0, 128
  %789 = vxpose.xlu0.b32.cont [10/16] 0.0, 128
  %790 = vxpose.xlu0.b32.cont [11/16] 0.0, 128
  %791 = vxpose.xlu0.b32.cont [12/16] 0.0, 128
  %792 = vxpose.xlu0.b32.cont [13/16] 0.0, 128
  %793 = vxpose.xlu0.b32.cont [14/16] 0.0, 128
  %794 = vxpose.xlu0.b32.cont [15/16] 0.0, 128
  %795 = vxpose.xlu0.b32.end [16/16] 0.0, 128
  %v796 = vpop.trf.xlu0
  %v797 = vpop.trf.xlu0
  %v798 = vpop.trf.xlu0
  %v799 = vpop.trf.xlu0
  %v800 = vpop.trf.xlu0
  %v801 = vpop.trf.xlu0
  %v802 = vpop.trf.xlu0
  %v803 = vpop.trf.xlu0
  %v804 = vpop.trf.xlu0
  %v805 = vpop.trf.xlu0
  %v806 = vpop.trf.xlu0
  %v807 = vpop.trf.xlu0
  %v808 = vpop.trf.xlu0
  %v809 = vpop.trf.xlu0
  %v810 = vpop.trf.xlu0
  %v811 = vpop.trf.xlu0
  %vm812 = vcmask 518144
  %813 = vst.msk [vmem:[%s9] sm:$0x7] %vm812, %v764
  %814 = vst.msk [vmem:[%s9 + $0x4] sm:$0x7] %vm812, %v796
  // Predicated region
  $region38: #{fold_forward.1} parent=0 // pred_check
    _
  $region39: #{fold_forward.1} parent=0 // pred_check_branch
    %816 = sbr.rel (0) target = $region41
  $region40: #{fold_forward.1} parent=0 // pred_region
    _
  $region41: #{fold_forward.1} parent=0 // pred_fallthru
    _
  // Predicated region
  $region42: #{fold_forward.1} parent=0 // pred_check
    _
  $region43: #{fold_forward.1} parent=0 // pred_check_branch
    %818 = sbr.rel (0) target = $region45
  $region44: #{fold_forward.1} parent=0 // pred_region
    _
  $region45: #{fold_forward.1} parent=0 // pred_fallthru
    _

</llo_original>
